<compile_context>
chip_gen: v6e
topology: v6e:2x2x1
jax: 0.10.0
libtpu: 0.0.40
codegen_flags: <defaults>
</compile_context>

<pallas_src>
import jax
import jax.numpy as jnp
from jax import lax
from jax.experimental import pallas as pl
from jax.experimental.pallas import tpu as pltpu


def _attention_head_kernel(xq_ref, xkv_ref, wq_ref, wk_ref, wv_ref, wp_ref,
                           b_ref, o_ref, acc_ref):
    # xq_ref : (1, tq, C)  bf16   query-row tile of x
    # xkv_ref: (1, N,  C)  bf16   full sequence (K/V source), resident across h
    # wq_ref : (1, C, hd)  bf16   this head's Q weight, softmax scale pre-folded
    # wk_ref : (1, C, hd)  bf16
    # wv_ref : (1, C, hd)  bf16
    # wp_ref : (1, hd, C)  bf16   this head's slice of the output projection
    # b_ref  : (1, C)      f32    projection bias
    # o_ref  : (1, tq, C)
    # acc_ref: (tq, C)     f32    output-projection accumulator (VMEM scratch)
    h = pl.program_id(2)

    @pl.when(h == 0)
    def _init():
        # Fuse the proj bias into the accumulator init (saves a (tq, C) VPU add).
        acc_ref[...] = jnp.broadcast_to(b_ref[...], acc_ref.shape)

    xq = xq_ref[0]     # (tq, C)
    xkv = xkv_ref[0]   # (N, C)
    wq = wq_ref[0]     # (C, hd)
    wk = wk_ref[0]
    wv = wv_ref[0]
    wp = wp_ref[0]     # (hd, C)

    # Per-head projections: bf16 MXU inputs, f32 accumulation.
    q = jnp.dot(xq, wq, preferred_element_type=jnp.float32).astype(jnp.bfloat16)   # (tq, hd)
    k = jnp.dot(xkv, wk, preferred_element_type=jnp.float32).astype(jnp.bfloat16)  # (N, hd)
    v = jnp.dot(xkv, wv, preferred_element_type=jnp.float32).astype(jnp.bfloat16)  # (N, hd)

    # Scores: contract on head_dim directly (no explicit k.T / XLU transpose).
    # Scale is already folded into wq on the host.
    s = lax.dot_general(q, k, dimension_numbers=(((1,), (1,)), ((), ())),
                        preferred_element_type=jnp.float32)                        # (tq, N)

    # Softmax in f32; denominator reciprocal on the EUP (approx is fine after
    # max-subtraction).
    s = s - jnp.max(s, axis=-1, keepdims=True)
    p = jnp.exp(s)
    p = p * pl.reciprocal(jnp.sum(p, axis=-1, keepdims=True), approx=True)

    # attn_drop is identity (ratio 0.0)
    ctx = jnp.dot(p.astype(jnp.bfloat16), v, preferred_element_type=jnp.float32)   # (tq, hd)

    # Head re-assembly is folded into the per-head projection weight block:
    # out = sum_h ctx_h @ Wproj[h*hd:(h+1)*hd, :]  (accumulated in f32).
    acc_ref[...] += jnp.dot(ctx.astype(jnp.bfloat16), wp,
                            preferred_element_type=jnp.float32)

    @pl.when(h == pl.num_programs(2) - 1)
    def _finalize():
        # proj_drop is identity (ratio 0.0)
        o_ref[0] = acc_ref[...].astype(o_ref.dtype)


def attention_pallas(x, w_qkv_t, w_proj_t, b_proj, *, num_heads):
    B, N, C = x.shape
    H = num_heads
    assert C % H == 0, "dim must be divisible by num_heads"
    hd = C // H
    scale = hd ** (-0.5)

    # ---- host/XLA-side parameter reorganization (outside the kernel) ----
    # w_qkv_t: (C, 3C), columns ordered [q heads | k heads | v heads],
    # each head block hd wide (torch reshape index: i3*C + h*hd + d).
    wq = (w_qkv_t[:, 0 * C:1 * C] * scale).reshape(C, H, hd).transpose(1, 0, 2)  # (H, C, hd), scale folded
    wk = w_qkv_t[:, 1 * C:2 * C].reshape(C, H, hd).transpose(1, 0, 2)            # (H, C, hd)
    wv = w_qkv_t[:, 2 * C:3 * C].reshape(C, H, hd).transpose(1, 0, 2)            # (H, C, hd)
    wp = w_proj_t.reshape(H, hd, C)                                              # rows are (h, d)

    # bf16 inputs for MXU throughput and half the weight/x DMA bytes.
    xb = x.astype(jnp.bfloat16)
    wq = wq.astype(jnp.bfloat16)
    wk = wk.astype(jnp.bfloat16)
    wv = wv.astype(jnp.bfloat16)
    wp = wp.astype(jnp.bfloat16)
    bp = b_proj.reshape(1, C).astype(jnp.float32)

    # Query tiling: one tile for typical ViT sequence lengths; 128-row tiles when
    # the sequence divides evenly (bounds live score rows and feeds the pipeline).
    tq = 128 if (N > 128 and N % 128 == 0) else N
    n_qt = N // tq

    grid = (B, n_qt, H)  # heads last = reduction axis (accumulator pattern)

    return pl.pallas_call(
        _attention_head_kernel,
        out_shape=jax.ShapeDtypeStruct((B, N, C), x.dtype),
        grid=grid,
        in_specs=[
            pl.BlockSpec((1, tq, C), lambda b, i, h: (b, i, 0)),   # x (query tile)
            pl.BlockSpec((1, N, C), lambda b, i, h: (b, 0, 0)),    # x (full seq, K/V source)
            pl.BlockSpec((1, C, hd), lambda b, i, h: (h, 0, 0)),   # Wq head block (scaled)
            pl.BlockSpec((1, C, hd), lambda b, i, h: (h, 0, 0)),   # Wk head block
            pl.BlockSpec((1, C, hd), lambda b, i, h: (h, 0, 0)),   # Wv head block
            pl.BlockSpec((1, hd, C), lambda b, i, h: (h, 0, 0)),   # Wproj head block
            pl.BlockSpec((1, C), lambda b, i, h: (0, 0)),          # proj bias
        ],
        out_specs=pl.BlockSpec((1, tq, C), lambda b, i, h: (b, i, 0)),
        scratch_shapes=[pltpu.VMEM((tq, C), jnp.float32)],
        compiler_params=pltpu.CompilerParams(
            dimension_semantics=("parallel", "parallel", "arbitrary"),
            vmem_limit_bytes=48 * 1024 * 1024,   # explicit budget; fits v7x's 64 MiB VMEM
        ),
    )(xb, xb, wq, wk, wv, wp, bp)


def attention_reference(x, w_qkv_t, w_proj_t, b_proj, *, num_heads):
    """Pure-JAX f32 reference mirroring the PyTorch forward."""
    B, N, C = x.shape
    head_dim = C // num_heads
    scale = head_dim ** (-0.5)
    qkv = x @ w_qkv_t                                    # (B, N, 3C)
    qkv = qkv.reshape(B, N, 3, num_heads, head_dim).transpose(2, 0, 3, 1, 4)
    q, k, v = qkv[0], qkv[1], qkv[2]                     # (B, H, N, hd)
    attn = (q @ jnp.swapaxes(k, -2, -1)) * scale
    attn = jax.nn.softmax(attn, axis=-1)
    out = (attn @ v).transpose(0, 2, 1, 3).reshape(B, N, C)
    return out @ w_proj_t + b_proj.reshape(1, C)


if __name__ == "__main__":
    # Small shapes consistent with the module: B=2, N=8 tokens, C=32 dim, 8 heads.
    B, N, C = 2, 8, 32
    num_heads = 8

    key = jax.random.PRNGKey(0)
    kx, kq, kp, kb = jax.random.split(key, 4)

    x = jax.random.normal(kx, (B, N, C), dtype=jnp.float32)
    # Deterministic synthetic parameters (pre-transposed to (in, out)).
    w_qkv_t = jax.random.normal(kq, (C, 3 * C), dtype=jnp.float32) * 0.05
    w_proj_t = jax.random.normal(kp, (C, C), dtype=jnp.float32) * 0.05
    b_proj = jax.random.normal(kb, (1, C), dtype=jnp.float32) * 0.05

    out = attention_pallas(x, w_qkv_t, w_proj_t, b_proj, num_heads=num_heads)
    out = jax.block_until_ready(out)

    ref = attention_reference(x, w_qkv_t, w_proj_t, b_proj, num_heads=num_heads)
    assert out.shape == (B, N, C)
    # bf16 matmul inputs + approx reciprocal -> loosened tolerance vs f32 reference.
    assert jnp.allclose(out, ref, atol=3e-2, rtol=3e-2), "mismatch vs reference"

    print("KERNEL_OK")
</pallas_src>

<mosaic_0001>
module attributes {stable_mosaic.version = 11 : i64} {
  func.func @_attention_head_kernel(%arg0: i32, %arg1: i32, %arg2: i32, %arg3: memref<1x8x32xbf16, #tpu.memory_space<vmem>>, %arg4: memref<1x8x32xbf16, #tpu.memory_space<vmem>>, %arg5: memref<1x32x4xbf16, #tpu.memory_space<vmem>>, %arg6: memref<1x32x4xbf16, #tpu.memory_space<vmem>>, %arg7: memref<1x32x4xbf16, #tpu.memory_space<vmem>>, %arg8: memref<1x4x32xbf16, #tpu.memory_space<vmem>>, %arg9: memref<1x32xf32, #tpu.memory_space<vmem>>, %arg10: memref<1x8x32xf32, #tpu.memory_space<vmem>>, %arg11: memref<8x32xf32, #tpu.memory_space<vmem>>) attributes {dimension_semantics = [#tpu.dimension_semantics<parallel>, #tpu.dimension_semantics<parallel>, #tpu.dimension_semantics<arbitrary>], iteration_bounds = array<i64: 2, 1, 8>, scalar_prefetch = 0 : i64, scratch_operands = 1 : i64, tpu.core_type = #tpu.core_type<tc>, window_params = [{transform_indices = @transform_0, window_bounds = array<i64: 1, 8, 32>}, {transform_indices = @transform_1, window_bounds = array<i64: 1, 8, 32>}, {transform_indices = @transform_2, window_bounds = array<i64: 1, 32, 4>}, {transform_indices = @transform_3, window_bounds = array<i64: 1, 32, 4>}, {transform_indices = @transform_4, window_bounds = array<i64: 1, 32, 4>}, {transform_indices = @transform_5, window_bounds = array<i64: 1, 4, 32>}, {pipeline_mode = #tpu.pipeline_mode<synchronous>, transform_indices = @transform_6, window_bounds = array<i64: 1, 32>}, {transform_indices = @transform_7, window_bounds = array<i64: 1, 8, 32>}]} {
    %c0_i32 = arith.constant 0 : i32
    %0 = arith.cmpi eq, %arg2, %c0_i32 : i32
    %1 = arith.extui %0 : i1 to i32
    %c0_i32_0 = arith.constant 0 : i32
    %2 = arith.cmpi ne, %1, %c0_i32_0 : i32
    scf.if %2 {
      %c0_30 = arith.constant 0 : index
      %c0_31 = arith.constant 0 : index
      %42 = vector.load %arg9[%c0_30, %c0_31] : memref<1x32xf32, #tpu.memory_space<vmem>>, vector<1x32xf32>
      %43 = vector.shape_cast %42 : vector<1x32xf32> to vector<1x32xf32>
      %44 = vector.broadcast %43 : vector<1x32xf32> to vector<8x32xf32>
      %c0_32 = arith.constant 0 : index
      %c0_33 = arith.constant 0 : index
      %45 = vector.load %arg11[%c0_32, %c0_33] : memref<8x32xf32, #tpu.memory_space<vmem>>, vector<8x32xf32>
      tpu.vector_store %arg11[%c0_32, %c0_33], %44 {strides = array<i32>} : memref<8x32xf32, #tpu.memory_space<vmem>>, vector<8x32xf32>,
    } else {
    }
    %c0 = arith.constant 0 : index
    %c0_1 = arith.constant 0 : index
    %c0_2 = arith.constant 0 : index
    %3 = vector.load %arg3[%c0, %c0_1, %c0_2] : memref<1x8x32xbf16, #tpu.memory_space<vmem>>, vector<1x8x32xbf16>
    %4 = vector.shape_cast %3 : vector<1x8x32xbf16> to vector<8x32xbf16>
    %c0_3 = arith.constant 0 : index
    %c0_4 = arith.constant 0 : index
    %c0_5 = arith.constant 0 : index
    %5 = vector.load %arg4[%c0_3, %c0_4, %c0_5] : memref<1x8x32xbf16, #tpu.memory_space<vmem>>, vector<1x8x32xbf16>
    %6 = vector.shape_cast %5 : vector<1x8x32xbf16> to vector<8x32xbf16>
    %c0_6 = arith.constant 0 : index
    %c0_7 = arith.constant 0 : index
    %c0_8 = arith.constant 0 : index
    %7 = vector.load %arg5[%c0_6, %c0_7, %c0_8] : memref<1x32x4xbf16, #tpu.memory_space<vmem>>, vector<1x32x4xbf16>
    %8 = vector.shape_cast %7 : vector<1x32x4xbf16> to vector<32x4xbf16>
    %c0_9 = arith.constant 0 : index
    %c0_10 = arith.constant 0 : index
    %c0_11 = arith.constant 0 : index
    %9 = vector.load %arg6[%c0_9, %c0_10, %c0_11] : memref<1x32x4xbf16, #tpu.memory_space<vmem>>, vector<1x32x4xbf16>
    %10 = vector.shape_cast %9 : vector<1x32x4xbf16> to vector<32x4xbf16>
    %c0_12 = arith.constant 0 : index
    %c0_13 = arith.constant 0 : index
    %c0_14 = arith.constant 0 : index
    %11 = vector.load %arg7[%c0_12, %c0_13, %c0_14] : memref<1x32x4xbf16, #tpu.memory_space<vmem>>, vector<1x32x4xbf16>
    %12 = vector.shape_cast %11 : vector<1x32x4xbf16> to vector<32x4xbf16>
    %c0_15 = arith.constant 0 : index
    %c0_16 = arith.constant 0 : index
    %c0_17 = arith.constant 0 : index
    %13 = vector.load %arg8[%c0_15, %c0_16, %c0_17] : memref<1x4x32xbf16, #tpu.memory_space<vmem>>, vector<1x4x32xbf16>
    %14 = vector.shape_cast %13 : vector<1x4x32xbf16> to vector<4x32xbf16>
    %cst = arith.constant dense<0.000000e+00> : vector<8x4xf32>
    %15 = tpu.matmul %4, %8, %cst {dimension_numbers = #tpu.dot_dimension_numbers<[1], [0], [0], [1], [0, 0, 1, 1], [], []>} : vector<8x32xbf16>, vector<32x4xbf16>, vector<8x4xf32> -> vector<8x4xf32>
    %16 = arith.truncf %15 : vector<8x4xf32> to vector<8x4xbf16>
    %cst_18 = arith.constant dense<0.000000e+00> : vector<8x4xf32>
    %17 = tpu.matmul %6, %10, %cst_18 {dimension_numbers = #tpu.dot_dimension_numbers<[1], [0], [0], [1], [0, 0, 1, 1], [], []>} : vector<8x32xbf16>, vector<32x4xbf16>, vector<8x4xf32> -> vector<8x4xf32>
    %18 = arith.truncf %17 : vector<8x4xf32> to vector<8x4xbf16>
    %cst_19 = arith.constant dense<0.000000e+00> : vector<8x4xf32>
    %19 = tpu.matmul %6, %12, %cst_19 {dimension_numbers = #tpu.dot_dimension_numbers<[1], [0], [0], [1], [0, 0, 1, 1], [], []>} : vector<8x32xbf16>, vector<32x4xbf16>, vector<8x4xf32> -> vector<8x4xf32>
    %20 = arith.truncf %19 : vector<8x4xf32> to vector<8x4xbf16>
    %cst_20 = arith.constant dense<0.000000e+00> : vector<8x8xf32>
    %21 = tpu.matmul %16, %18, %cst_20 {dimension_numbers = #tpu.dot_dimension_numbers<[1], [1], [0], [0], [0, 0, 1, 0], [], []>} : vector<8x4xbf16>, vector<8x4xbf16>, vector<8x8xf32> -> vector<8x8xf32>
    %cst_21 = arith.constant dense<0xFF800000> : vector<8xf32>
    %22 = vector.multi_reduction <maximumf>, %21, %cst_21 [1] : vector<8x8xf32> to vector<8xf32>
    %23 = vector.shape_cast %22 : vector<8xf32> to vector<8x1xf32>
    %24 = vector.broadcast %23 : vector<8x1xf32> to vector<8x8xf32>
    %25 = arith.subf %21, %24 : vector<8x8xf32>
    %26 = math.exp %25 : vector<8x8xf32>
    %cst_22 = arith.constant dense<0.000000e+00> : vector<8xf32>
    %27 = vector.multi_reduction <add>, %26, %cst_22 [1] : vector<8x8xf32> to vector<8xf32>
    %28 = vector.shape_cast %27 : vector<8xf32> to vector<8x1xf32>
    %29 = tpu.reciprocal %28 {approx = true} : vector<8x1xf32> -> vector<8x1xf32>
    %30 = vector.broadcast %29 : vector<8x1xf32> to vector<8x8xf32>
    %31 = arith.mulf %26, %30 : vector<8x8xf32>
    %32 = arith.truncf %31 : vector<8x8xf32> to vector<8x8xbf16>
    %cst_23 = arith.constant dense<0.000000e+00> : vector<8x4xf32>
    %33 = tpu.matmul %32, %20, %cst_23 {dimension_numbers = #tpu.dot_dimension_numbers<[1], [0], [0], [1], [0, 0, 1, 1], [], []>} : vector<8x8xbf16>, vector<8x4xbf16>, vector<8x4xf32> -> vector<8x4xf32>
    %c0_24 = arith.constant 0 : index
    %c0_25 = arith.constant 0 : index
    %34 = vector.load %arg11[%c0_24, %c0_25] : memref<8x32xf32, #tpu.memory_space<vmem>>, vector<8x32xf32>
    %35 = arith.truncf %33 : vector<8x4xf32> to vector<8x4xbf16>
    %cst_26 = arith.constant dense<0.000000e+00> : vector<8x32xf32>
    %36 = tpu.matmul %35, %14, %cst_26 {dimension_numbers = #tpu.dot_dimension_numbers<[1], [0], [0], [1], [0, 0, 1, 1], [], []>} : vector<8x4xbf16>, vector<4x32xbf16>, vector<8x32xf32> -> vector<8x32xf32>
    %37 = arith.addf %34, %36 : vector<8x32xf32>
    %c0_27 = arith.constant 0 : index
    %c0_28 = arith.constant 0 : index
    %38 = vector.load %arg11[%c0_27, %c0_28] : memref<8x32xf32, #tpu.memory_space<vmem>>, vector<8x32xf32>
    tpu.vector_store %arg11[%c0_27, %c0_28], %37 {strides = array<i32>} : memref<8x32xf32, #tpu.memory_space<vmem>>, vector<8x32xf32>,
    %c7_i32 = arith.constant 7 : i32
    %39 = arith.cmpi eq, %arg2, %c7_i32 : i32
    %40 = arith.extui %39 : i1 to i32
    %c0_i32_29 = arith.constant 0 : i32
    %41 = arith.cmpi ne, %40, %c0_i32_29 : i32
    scf.if %41 {
      %c0_30 = arith.constant 0 : index
      %c0_31 = arith.constant 0 : index
      %42 = vector.load %arg11[%c0_30, %c0_31] : memref<8x32xf32, #tpu.memory_space<vmem>>, vector<8x32xf32>
      %c0_32 = arith.constant 0 : index
      %c0_33 = arith.constant 0 : index
      %c0_34 = arith.constant 0 : index
      %43 = vector.load %arg10[%c0_32, %c0_33, %c0_34] : memref<1x8x32xf32, #tpu.memory_space<vmem>>, vector<1x8x32xf32>
      %44 = vector.shape_cast %43 : vector<1x8x32xf32> to vector<8x32xf32>
      %45 = vector.shape_cast %42 : vector<8x32xf32> to vector<1x8x32xf32>
      tpu.vector_store %arg10[%c0_32, %c0_33, %c0_34], %45 {strides = array<i32>} : memref<1x8x32xf32, #tpu.memory_space<vmem>>, vector<1x8x32xf32>,
    } else {
    }
    return
  }
  func.func @transform_0(%arg0: i32, %arg1: i32, %arg2: i32) -> (i32, i32, i32) {
    %c0_i32 = arith.constant 0 : i32
    %c0_i32_0 = arith.constant 0 : i32
    return %arg0, %arg1, %c0_i32 : i32, i32, i32
  }
  func.func @transform_1(%arg0: i32, %arg1: i32, %arg2: i32) -> (i32, i32, i32) {
    %c0_i32 = arith.constant 0 : i32
    %c0_i32_0 = arith.constant 0 : i32
    %c0_i32_1 = arith.constant 0 : i32
    return %arg0, %c0_i32, %c0_i32_0 : i32, i32, i32
  }
  func.func @transform_2(%arg0: i32, %arg1: i32, %arg2: i32) -> (i32, i32, i32) {
    %c0_i32 = arith.constant 0 : i32
    %c0_i32_0 = arith.constant 0 : i32
    %c0_i32_1 = arith.constant 0 : i32
    return %arg2, %c0_i32, %c0_i32_0 : i32, i32, i32
  }
  func.func @transform_3(%arg0: i32, %arg1: i32, %arg2: i32) -> (i32, i32, i32) {
    %c0_i32 = arith.constant 0 : i32
    %c0_i32_0 = arith.constant 0 : i32
    %c0_i32_1 = arith.constant 0 : i32
    return %arg2, %c0_i32, %c0_i32_0 : i32, i32, i32
  }
  func.func @transform_4(%arg0: i32, %arg1: i32, %arg2: i32) -> (i32, i32, i32) {
    %c0_i32 = arith.constant 0 : i32
    %c0_i32_0 = arith.constant 0 : i32
    %c0_i32_1 = arith.constant 0 : i32
    return %arg2, %c0_i32, %c0_i32_0 : i32, i32, i32
  }
  func.func @transform_5(%arg0: i32, %arg1: i32, %arg2: i32) -> (i32, i32, i32) {
    %c0_i32 = arith.constant 0 : i32
    %c0_i32_0 = arith.constant 0 : i32
    %c0_i32_1 = arith.constant 0 : i32
    return %arg2, %c0_i32, %c0_i32_0 : i32, i32, i32
  }
  func.func @transform_6(%arg0: i32, %arg1: i32, %arg2: i32) -> (i32, i32) {
    %c0_i32 = arith.constant 0 : i32
    %c0_i32_0 = arith.constant 0 : i32
    %c0_i32_1 = arith.constant 0 : i32
    return %c0_i32, %c0_i32_0 : i32, i32
  }
  func.func @transform_7(%arg0: i32, %arg1: i32, %arg2: i32) -> (i32, i32, i32) {
    %c0_i32 = arith.constant 0 : i32
    %c0_i32_0 = arith.constant 0 : i32
    return %arg0, %arg1, %c0_i32 : i32, i32, i32
  }
}

</mosaic_0001>

<llo_original>
// kernel: tpu_custom_call.1
$region0: #{tpu_custom_call.1}
  #allocation0 [shape = 'u32[]', space=smem, size = 0x4, offset = 0x4, fixed_abs, tag = 'smem constant byte address 0x4 - core index']
  #allocation1 [shape = 'u32[144,128]{1,0:T(1,128)}', space=vmem, size = 0x12000, scoped, tag = 'internal scratch']
  #allocation2 [shape = 'f32[8,32]{1,0:T(8,128)}', space=vmem, size = 0x1000, scoped, tag = 'scratch operand']
  %s0 = inlined_call_operand.vmem [shape: bf16[2,8,32], index: 0, kind: input, shape index: {}]
  %s1 = inlined_call_operand.vmem [shape: bf16[2,8,32], index: 1, kind: input, shape index: {}]
  %s2 = inlined_call_operand.vmem [shape: bf16[8,32,4], index: 2, kind: input, shape index: {}]
  %s3 = inlined_call_operand.vmem [shape: bf16[8,32,4], index: 3, kind: input, shape index: {}]
  %s4 = inlined_call_operand.vmem [shape: bf16[8,32,4], index: 4, kind: input, shape index: {}]
  %s5 = inlined_call_operand.vmem [shape: bf16[8,4,32], index: 5, kind: input, shape index: {}]
  %s6 = inlined_call_operand.vmem [shape: f32[1,32], index: 6, kind: input, shape index: {}]
  %s7 = inlined_call_operand.hbm [shape: f32[2,8,32], index: 7, kind: output, shape index: {}]
  %s8 = sld [smem:[#allocation0]]
  $region69: #{tpu_custom_call.1} parent=0
    _
  %s10 = ssub.s32 1, %s8
  %s11 = scalar_select 0, %s10, %s8
  $region1: #{tpu_custom_call.1} parent=0
    #allocation3 [shape = 'u8[8192]{0}', space=vmem, size = 0x2000, scoped, tag = 'output window, operand 0']
    #allocation4 [shape = 's32[2]{0}', space=sflag, size = 0x8, scoped, tag = 'scoped memory for tpu_custom_call.1']
    %12 = vsyncpa [#allocation4], 0
    %s13 = scalar_lea.sflag [#allocation4], 1
    %14 = vsyncpa %s13, 0
    loop: start=0, step=1, limit=18
    $region2: #{tpu_custom_call.1} parent=1 // loop_pre_header
      _
    $region3: #{tpu_custom_call.1} parent=1 // loop_header
      %s16 = sphi 0, %s20
      %p17 = scmp.ge.s32.totalorder %s16, 18
      %s23 = sphi 0, %s42
      %s24 = sphi 0, %s38
      %s25 = sphi 0, %s34
      %s26 = sphi 0, %s23
      %s27 = sphi 0, %s24
      %s28 = sphi 0, %s25
      %s29 = sphi 0, %s26
      %s30 = sphi 0, %s27
      %s31 = sphi 0, %s28
      %s47 = sphi 0, %s49
      %s50 = sphi 0, %s47
      %s51 = sphi 0, %s50
      %s67 = sphi 0, %s51
      %s73 = sphi 0, %s75
      %s76 = sphi 0, %s73
      %s77 = sphi 0, %s76
      %s93 = sphi 0, %s77
      %s99 = sphi 0, %s101
      %s102 = sphi 0, %s99
      %s103 = sphi 0, %s102
      %s119 = sphi 0, %s103
      %s125 = sphi 0, %s127
      %s128 = sphi 0, %s125
      %s129 = sphi 0, %s128
      %s145 = sphi 0, %s129
      %s151 = sphi 0, %s153
      %s154 = sphi 0, %s151
      %s155 = sphi 0, %s154
      %s171 = sphi 0, %s155
      %s177 = sphi 0, %s179
      %s180 = sphi 0, %s177
      %s181 = sphi 0, %s180
      %s197 = sphi 0, %s181
      %s201 = sphi 0, %s201
      %s203 = sphi 0, %s201
      %s204 = sphi 0, %s203
      %s218 = sphi 0, %s204
      %s226 = sphi 0, %s228
      %s229 = sphi 0, %s226
      %s230 = sphi 0, %s229
      %s246 = sphi 0, %s230
    $region4: #{tpu_custom_call.1} parent=1 // loop_header_branch
      %19 = sbr.rel (%p17) target = $region8
    $region5: #{tpu_custom_call.1} parent=1 // loop_body
      %s21 = ssub.s32 %s16, 1
      %s22 = ssub.s32 %s16, 2
      %s32 = sadd.s32 1, %s25
      %p33 = scmp.ge.s32.totalorder %s32, 8
      %s34 = scalar_select %p33, 0, %s32
      %s35 = sadd.s32 1, %s24
      %s36 = scalar_select %p33, %s35, %s24
      %p37 = scmp.ge.s32.totalorder %s36, 1
      %s38 = scalar_select %p37, 0, %s36
      %s39 = sadd.s32 1, %s23
      %s40 = scalar_select %p37, %s39, %s23
      %p41 = scmp.ge.s32.totalorder %s40, 2
      %s42 = scalar_select %p41, 0, %s40
      %s43 = ssub.s32 %s23, %s42
      %s44 = ssub.s32 %s24, %s38
      %s45 = sor.u32 %s43, %s44
      %p46 = scmp.eq.s32.totalorder %s45, 0
      %s48 = sadd.s32 %s47, 1
      %s49 = scalar_select %p46, %s47, %s48
      %p52 = pneg %p46
      %p53 = scmp.eq.s32.totalorder %s16, 15
      %p54 = por %p52, %p53
      %p55 = scmp.ne.s32.totalorder %s47, %s50
      %p56 = scmp.eq.s32.totalorder %s16, 0
      %p57 = por %p55, %p56
      %p58 = scmp.ne.s32.totalorder %s47, %s50
      %p59 = scmp.eq.s32.totalorder %s21, 15
      %p60 = por %p58, %p59
      %p61 = scmp.ne.s32.totalorder %s50, %s51
      %p62 = scmp.eq.s32.totalorder %s21, 0
      %p63 = por %p61, %p62
      %p64 = scmp.ne.s32.totalorder %s50, %s51
      %p65 = scmp.eq.s32.totalorder %s22, 15
      %p66 = por %p64, %p65
      %p68 = scmp.ne.s32.totalorder %s51, %s67
      %p69 = scmp.eq.s32.totalorder %s22, 0
      %p70 = por %p68, %p69
      %s71 = ssub.s32 %s23, %s42
      %p72 = scmp.eq.s32.totalorder %s71, 0
      %s74 = sadd.s32 %s73, 1
      %s75 = scalar_select %p72, %s73, %s74
      %p78 = pneg %p72
      %p79 = scmp.eq.s32.totalorder %s16, 15
      %p80 = por %p78, %p79
      %p81 = scmp.ne.s32.totalorder %s73, %s76
      %p82 = scmp.eq.s32.totalorder %s16, 0
      %p83 = por %p81, %p82
      %p84 = scmp.ne.s32.totalorder %s73, %s76
      %p85 = scmp.eq.s32.totalorder %s21, 15
      %p86 = por %p84, %p85
      %p87 = scmp.ne.s32.totalorder %s76, %s77
      %p88 = scmp.eq.s32.totalorder %s21, 0
      %p89 = por %p87, %p88
      %p90 = scmp.ne.s32.totalorder %s76, %s77
      %p91 = scmp.eq.s32.totalorder %s22, 15
      %p92 = por %p90, %p91
      %p94 = scmp.ne.s32.totalorder %s77, %s93
      %p95 = scmp.eq.s32.totalorder %s22, 0
      %p96 = por %p94, %p95
      %s97 = ssub.s32 %s25, %s34
      %p98 = scmp.eq.s32.totalorder %s97, 0
      %s100 = sadd.s32 %s99, 1
      %s101 = scalar_select %p98, %s99, %s100
      %p104 = pneg %p98
      %p105 = scmp.eq.s32.totalorder %s16, 15
      %p106 = por %p104, %p105
      %p107 = scmp.ne.s32.totalorder %s99, %s102
      %p108 = scmp.eq.s32.totalorder %s16, 0
      %p109 = por %p107, %p108
      %p110 = scmp.ne.s32.totalorder %s99, %s102
      %p111 = scmp.eq.s32.totalorder %s21, 15
      %p112 = por %p110, %p111
      %p113 = scmp.ne.s32.totalorder %s102, %s103
      %p114 = scmp.eq.s32.totalorder %s21, 0
      %p115 = por %p113, %p114
      %p116 = scmp.ne.s32.totalorder %s102, %s103
      %p117 = scmp.eq.s32.totalorder %s22, 15
      %p118 = por %p116, %p117
      %p120 = scmp.ne.s32.totalorder %s103, %s119
      %p121 = scmp.eq.s32.totalorder %s22, 0
      %p122 = por %p120, %p121
      %s123 = ssub.s32 %s25, %s34
      %p124 = scmp.eq.s32.totalorder %s123, 0
      %s126 = sadd.s32 %s125, 1
      %s127 = scalar_select %p124, %s125, %s126
      %p130 = pneg %p124
      %p131 = scmp.eq.s32.totalorder %s16, 15
      %p132 = por %p130, %p131
      %p133 = scmp.ne.s32.totalorder %s125, %s128
      %p134 = scmp.eq.s32.totalorder %s16, 0
      %p135 = por %p133, %p134
      %p136 = scmp.ne.s32.totalorder %s125, %s128
      %p137 = scmp.eq.s32.totalorder %s21, 15
      %p138 = por %p136, %p137
      %p139 = scmp.ne.s32.totalorder %s128, %s129
      %p140 = scmp.eq.s32.totalorder %s21, 0
      %p141 = por %p139, %p140
      %p142 = scmp.ne.s32.totalorder %s128, %s129
      %p143 = scmp.eq.s32.totalorder %s22, 15
      %p144 = por %p142, %p143
      %p146 = scmp.ne.s32.totalorder %s129, %s145
      %p147 = scmp.eq.s32.totalorder %s22, 0
      %p148 = por %p146, %p147
      %s149 = ssub.s32 %s25, %s34
      %p150 = scmp.eq.s32.totalorder %s149, 0
      %s152 = sadd.s32 %s151, 1
      %s153 = scalar_select %p150, %s151, %s152
      %p156 = pneg %p150
      %p157 = scmp.eq.s32.totalorder %s16, 15
      %p158 = por %p156, %p157
      %p159 = scmp.ne.s32.totalorder %s151, %s154
      %p160 = scmp.eq.s32.totalorder %s16, 0
      %p161 = por %p159, %p160
      %p162 = scmp.ne.s32.totalorder %s151, %s154
      %p163 = scmp.eq.s32.totalorder %s21, 15
      %p164 = por %p162, %p163
      %p165 = scmp.ne.s32.totalorder %s154, %s155
      %p166 = scmp.eq.s32.totalorder %s21, 0
      %p167 = por %p165, %p166
      %p168 = scmp.ne.s32.totalorder %s154, %s155
      %p169 = scmp.eq.s32.totalorder %s22, 15
      %p170 = por %p168, %p169
      %p172 = scmp.ne.s32.totalorder %s155, %s171
      %p173 = scmp.eq.s32.totalorder %s22, 0
      %p174 = por %p172, %p173
      %s175 = ssub.s32 %s25, %s34
      %p176 = scmp.eq.s32.totalorder %s175, 0
      %s178 = sadd.s32 %s177, 1
      %s179 = scalar_select %p176, %s177, %s178
      %p182 = pneg %p176
      %p183 = scmp.eq.s32.totalorder %s16, 15
      %p184 = por %p182, %p183
      %p185 = scmp.ne.s32.totalorder %s177, %s180
      %p186 = scmp.eq.s32.totalorder %s16, 0
      %p187 = por %p185, %p186
      %p188 = scmp.ne.s32.totalorder %s177, %s180
      %p189 = scmp.eq.s32.totalorder %s21, 15
      %p190 = por %p188, %p189
      %p191 = scmp.ne.s32.totalorder %s180, %s181
      %p192 = scmp.eq.s32.totalorder %s21, 0
      %p193 = por %p191, %p192
      %p194 = scmp.ne.s32.totalorder %s180, %s181
      %p195 = scmp.eq.s32.totalorder %s22, 15
      %p196 = por %p194, %p195
      %p198 = scmp.ne.s32.totalorder %s181, %s197
      %p199 = scmp.eq.s32.totalorder %s22, 0
      %p200 = por %p198, %p199
      %s202 = sadd.s32 %s201, 1
      %p205 = scmp.eq.s32.totalorder %s16, 15
      %p206 = scmp.ne.s32.totalorder %s201, %s203
      %p207 = scmp.eq.s32.totalorder %s16, 0
      %p208 = por %p206, %p207
      %p209 = scmp.ne.s32.totalorder %s201, %s203
      %p210 = scmp.eq.s32.totalorder %s21, 15
      %p211 = por %p209, %p210
      %p212 = scmp.ne.s32.totalorder %s203, %s204
      %p213 = scmp.eq.s32.totalorder %s21, 0
      %p214 = por %p212, %p213
      %p215 = scmp.ne.s32.totalorder %s203, %s204
      %p216 = scmp.eq.s32.totalorder %s22, 15
      %p217 = por %p215, %p216
      %p219 = scmp.ne.s32.totalorder %s204, %s218
      %p220 = scmp.eq.s32.totalorder %s22, 0
      %p221 = por %p219, %p220
      %s222 = ssub.s32 %s23, %s42
      %s223 = ssub.s32 %s24, %s38
      %s224 = sor.u32 %s222, %s223
      %p225 = scmp.eq.s32.totalorder %s224, 0
      %s227 = sadd.s32 %s226, 1
      %s228 = scalar_select %p225, %s226, %s227
      %p231 = pneg %p225
      %p232 = scmp.eq.s32.totalorder %s16, 15
      %p233 = por %p231, %p232
      %p234 = scmp.ne.s32.totalorder %s226, %s229
      %p235 = scmp.eq.s32.totalorder %s16, 0
      %p236 = por %p234, %p235
      %p237 = scmp.ne.s32.totalorder %s226, %s229
      %p238 = scmp.eq.s32.totalorder %s21, 15
      %p239 = por %p237, %p238
      %p240 = scmp.ne.s32.totalorder %s229, %s230
      %p241 = scmp.eq.s32.totalorder %s21, 0
      %p242 = por %p240, %p241
      %p243 = scmp.ne.s32.totalorder %s229, %s230
      %p244 = scmp.eq.s32.totalorder %s22, 15
      %p245 = por %p243, %p244
      %p247 = scmp.ne.s32.totalorder %s230, %s246
      %p248 = scmp.eq.s32.totalorder %s22, 0
      %p249 = por %p247, %p248
      %p250 = scmp.le.s32.totalorder 1, %s16
      %p251 = scmp.lt.s32.totalorder %s16, 17
      %p252 = pnand %p250, %p251
      %p253 = pneg %p252
      // Predicated region
      $region9: #{tpu_custom_call.1} parent=5 // pred_check
        _
      $region10: #{tpu_custom_call.1} parent=5 // pred_check_branch
        %255 = sbr.rel (%p252) target = $region12
      $region11: #{tpu_custom_call.1} parent=5 // pred_region
        %s256 = ssub.s32 %s16, 1
        // Predicated region
        $region13: #{tpu_custom_call.1} parent=11 // pred_check
          %p257 = pneg %p214
        $region14: #{tpu_custom_call.1} parent=11 // pred_check_branch
          %259 = sbr.rel (%p257) target = $region16
        $region15: #{tpu_custom_call.1} parent=11 // pred_region
          _
        $region16: #{tpu_custom_call.1} parent=11 // pred_fallthru
          _
      $region12: #{tpu_custom_call.1} parent=5 // pred_fallthru
        _
      %p260 = scmp.lt.s32.totalorder %s16, 16
      // Predicated region
      $region17: #{tpu_custom_call.1} parent=5 // pred_check
        %p261 = pneg %p260
      $region18: #{tpu_custom_call.1} parent=5 // pred_check_branch
        %263 = sbr.rel (%p261) target = $region20
      $region19: #{tpu_custom_call.1} parent=5 // pred_region
        // Predicated region
        $region21: #{tpu_custom_call.1} parent=19 // pred_check
          %p264 = pneg %p57
        $region22: #{tpu_custom_call.1} parent=19 // pred_check_branch
          %266 = sbr.rel (%p264) target = $region24
        $region23: #{tpu_custom_call.1} parent=19 // pred_region
          %p267 = scmp.lt.s32.totalorder %s23, 1
          %s268 = scalar_select %p267, %s23, 1
          %p269 = scmp.lt.s32.totalorder %s24, 0
          %s270 = scalar_select %p269, %s24, 0
          %s271 = sadd.s32 %s270, %s268
          %s272 = smul.addr %s271, 4
          %s273 = scalar_lea.vmem %s0, %s272
        $region24: #{tpu_custom_call.1} parent=19 // pred_fallthru
          _
        // Predicated region
        $region25: #{tpu_custom_call.1} parent=19 // pred_check
          %p274 = pneg %p83
        $region26: #{tpu_custom_call.1} parent=19 // pred_check_branch
          %276 = sbr.rel (%p274) target = $region28
        $region27: #{tpu_custom_call.1} parent=19 // pred_region
          %p277 = scmp.lt.s32.totalorder %s23, 1
          %s278 = scalar_select %p277, %s23, 1
          %s279 = smul.addr %s278, 4
          %s280 = scalar_lea.vmem %s1, %s279
        $region28: #{tpu_custom_call.1} parent=19 // pred_fallthru
          _
        // Predicated region
        $region29: #{tpu_custom_call.1} parent=19 // pred_check
          %p281 = pneg %p109
        $region30: #{tpu_custom_call.1} parent=19 // pred_check_branch
          %283 = sbr.rel (%p281) target = $region32
        $region31: #{tpu_custom_call.1} parent=19 // pred_region
          %p284 = scmp.lt.s32.totalorder %s25, 7
          %s285 = scalar_select %p284, %s25, 7
          %s286 = smul.addr %s285, 4
          %s287 = smul.addr %s286, 4
          %s288 = scalar_lea.vmem %s2, %s287
        $region32: #{tpu_custom_call.1} parent=19 // pred_fallthru
          _
        // Predicated region
        $region33: #{tpu_custom_call.1} parent=19 // pred_check
          %p289 = pneg %p135
        $region34: #{tpu_custom_call.1} parent=19 // pred_check_branch
          %291 = sbr.rel (%p289) target = $region36
        $region35: #{tpu_custom_call.1} parent=19 // pred_region
          %p292 = scmp.lt.s32.totalorder %s25, 7
          %s293 = scalar_select %p292, %s25, 7
          %s294 = smul.addr %s293, 4
          %s295 = smul.addr %s294, 4
          %s296 = scalar_lea.vmem %s3, %s295
        $region36: #{tpu_custom_call.1} parent=19 // pred_fallthru
          _
        // Predicated region
        $region37: #{tpu_custom_call.1} parent=19 // pred_check
          %p297 = pneg %p161
        $region38: #{tpu_custom_call.1} parent=19 // pred_check_branch
          %299 = sbr.rel (%p297) target = $region40
        $region39: #{tpu_custom_call.1} parent=19 // pred_region
          %p300 = scmp.lt.s32.totalorder %s25, 7
          %s301 = scalar_select %p300, %s25, 7
          %s302 = smul.addr %s301, 4
          %s303 = smul.addr %s302, 4
          %s304 = scalar_lea.vmem %s4, %s303
        $region40: #{tpu_custom_call.1} parent=19 // pred_fallthru
          _
        // Predicated region
        $region41: #{tpu_custom_call.1} parent=19 // pred_check
          %p305 = pneg %p187
        $region42: #{tpu_custom_call.1} parent=19 // pred_check_branch
          %307 = sbr.rel (%p305) target = $region44
        $region43: #{tpu_custom_call.1} parent=19 // pred_region
          %p308 = scmp.lt.s32.totalorder %s25, 7
          %s309 = scalar_select %p308, %s25, 7
          %s310 = smul.addr %s309, 2
          %s311 = scalar_lea.vmem %s5, %s310
        $region44: #{tpu_custom_call.1} parent=19 // pred_fallthru
          _
      $region20: #{tpu_custom_call.1} parent=5 // pred_fallthru
        _
      %p312 = scmp.le.s32.totalorder 1, %s16
      %p313 = scmp.lt.s32.totalorder %s16, 17
      %p314 = pnand %p312, %p313
      %p315 = pneg %p314
      // Predicated region
      $region45: #{tpu_custom_call.1} parent=5 // pred_check
        _
      $region46: #{tpu_custom_call.1} parent=5 // pred_check_branch
        %317 = sbr.rel (%p314) target = $region48
      $region47: #{tpu_custom_call.1} parent=5 // pred_region
        %s318 = ssub.s32 %s16, 1
        %p319 = scmp.lt.s32.totalorder %s26, 1
        %s320 = scalar_select %p319, %s26, 1
        %p321 = scmp.lt.s32.totalorder %s27, 0
        %s322 = scalar_select %p321, %s27, 0
        %s323 = sadd.s32 %s322, %s320
        %s324 = smul.addr %s323, 4
        %s325 = scalar_lea.vmem %s0, %s324
        %p326 = pneg %p63
        %p327 = pneg %p60
        %p328 = scmp.lt.s32.totalorder %s26, 1
        %s329 = scalar_select %p328, %s26, 1
        %s330 = smul.addr %s329, 4
        %s331 = scalar_lea.vmem %s1, %s330
        %p332 = pneg %p89
        %p333 = pneg %p86
        %p334 = scmp.lt.s32.totalorder %s28, 7
        %s335 = scalar_select %p334, %s28, 7
        %s336 = smul.addr %s335, 4
        %s337 = smul.addr %s336, 4
        %s338 = scalar_lea.vmem %s2, %s337
        %p339 = pneg %p115
        %p340 = pneg %p112
        %p341 = scmp.lt.s32.totalorder %s28, 7
        %s342 = scalar_select %p341, %s28, 7
        %s343 = smul.addr %s342, 4
        %s344 = smul.addr %s343, 4
        %s345 = scalar_lea.vmem %s3, %s344
        %p346 = pneg %p141
        %p347 = pneg %p138
        %p348 = scmp.lt.s32.totalorder %s28, 7
        %s349 = scalar_select %p348, %s28, 7
        %s350 = smul.addr %s349, 4
        %s351 = smul.addr %s350, 4
        %s352 = scalar_lea.vmem %s4, %s351
        %p353 = pneg %p167
        %p354 = pneg %p164
        %p355 = scmp.lt.s32.totalorder %s28, 7
        %s356 = scalar_select %p355, %s28, 7
        %s357 = smul.addr %s356, 2
        %s358 = scalar_lea.vmem %s5, %s357
        %p359 = pneg %p193
        %p360 = pneg %p190
        %p361 = pneg %p214
        %p362 = pneg %p211
        %p363 = pneg %p242
        %p364 = pneg %p239
        %s365 = sand.u32 %s229, 1
        %s366 = scalar_lea.sflag [#allocation4], %s365
        %s367 = sand.u32 %s229, 1
        %s368 = smul.addr %s367, 8
        %s369 = scalar_lea.vmem [#allocation3], %s368
        %p370 = scmp.lt.s32.totalorder %s26, 1
        %s371 = scalar_select %p370, %s26, 1
        %p372 = scmp.lt.s32.totalorder %s27, 0
        %s373 = scalar_select %p372, %s27, 0
        %s374 = sadd.s32 %s373, %s371
        %s375 = smul.addr %s374, 4
        %s376 = scalar_lea.vmem %s0, %s375
        %p377 = scmp.lt.s32.totalorder %s26, 1
        %s378 = scalar_select %p377, %s26, 1
        %s379 = smul.addr %s378, 4
        %s380 = scalar_lea.vmem %s1, %s379
        %p381 = scmp.lt.s32.totalorder %s28, 7
        %s382 = scalar_select %p381, %s28, 7
        %s383 = smul.addr %s382, 4
        %s384 = smul.addr %s383, 4
        %s385 = scalar_lea.vmem %s2, %s384
        %p386 = scmp.lt.s32.totalorder %s28, 7
        %s387 = scalar_select %p386, %s28, 7
        %s388 = smul.addr %s387, 4
        %s389 = smul.addr %s388, 4
        %s390 = scalar_lea.vmem %s3, %s389
        %p391 = scmp.lt.s32.totalorder %s28, 7
        %s392 = scalar_select %p391, %s28, 7
        %s393 = smul.addr %s392, 4
        %s394 = smul.addr %s393, 4
        %s395 = scalar_lea.vmem %s4, %s394
        %p396 = scmp.lt.s32.totalorder %s28, 7
        %s397 = scalar_select %p396, %s28, 7
        %s398 = smul.addr %s397, 2
        %s399 = scalar_lea.vmem %s5, %s398
        %p401 = scmp.eq.s32.totalorder %s28, 0
        // Predicated region
        $region49: #{tpu_custom_call.1} parent=47 // pred_check
          %p402 = pneg %p401
        $region50: #{tpu_custom_call.1} parent=47 // pred_check_branch
          %404 = sbr.rel (%p402) target = $region52
        $region51: #{tpu_custom_call.1} parent=47 // pred_region
          %v405 = vld [vmem:[%s6] sm:$0x1]
          %v407 = vlaneseq
          %v408 = vshrl.u32 %v407, 7
          %v409 = vsub.s32 0, %v408
          %v410 = vrot.slane %v405, %v409
          %vm412 = vcmask 261120
          %413 = vst.msk [vmem:[#allocation2] sm:$0xff] %vm412, %v410
        $region52: #{tpu_custom_call.1} parent=47 // pred_fallthru
          _
        %v414 = vld [vmem:[%s376] sm:$0xf]
        %v415 = vld [vmem:[%s380] sm:$0xf]
        %v416 = vld [vmem:[%s385] sm:$0xf]
        %v417 = vld [vmem:[%s385 + $0x4] sm:$0xf]
        %v418 = vld [vmem:[%s385 + $0x8] sm:$0xf]
        %v419 = vld [vmem:[%s385 + $0xc] sm:$0xf]
        %v420 = vld [vmem:[%s390] sm:$0xf]
        %v421 = vld [vmem:[%s390 + $0x4] sm:$0xf]
        %v422 = vld [vmem:[%s390 + $0x8] sm:$0xf]
        %v423 = vld [vmem:[%s390 + $0xc] sm:$0xf]
        %v424 = vld [vmem:[%s395] sm:$0xf]
        %v425 = vld [vmem:[%s395 + $0x4] sm:$0xf]
        %v426 = vld [vmem:[%s395 + $0x8] sm:$0xf]
        %v427 = vld [vmem:[%s395 + $0xc] sm:$0xf]
        %v428 = vld [vmem:[%s399] sm:$0x3]
        %v433 = vunpack.c.l.b16 %v416
        %v434 = vunpack.c.l.b16 %v417
        %v435 = vunpack.c.l.b16 %v418
        %v436 = vunpack.c.l.b16 %v419
        %v437 = vpack.c.b16 %v434, %v433
        %v438 = vpack.c.b16 %v436, %v435
        %vm441 = vcmask 261120
        %v443 = vsel %vm441, %v414, 0
        %445 = vmatprep.subr.bf16.mxu0 0
        %446 = vmatpush1.bf16.msra.mxu0 0
        %447 = vmatprep.subr.bf16.mxu0 0
        %448 = vmatpush1.bf16.msra.mxu0 0
        %449 = vmatprep.subr.bf16.mxu0 0
        %450 = vmatpush1.bf16.msra.mxu0 0
        %451 = vmatprep.subr.bf16.mxu0 0
        %452 = vmatpush1.bf16.msra.mxu0 0
        %453 = vmatprep.subr.bf16.mxu0 0
        %454 = vmatpush1.bf16.msra.mxu0 0
        %455 = vmatprep.subr.bf16.mxu0 0
        %456 = vmatpush1.bf16.msra.mxu0 0
        %457 = vmatprep.subr.bf16.mxu0 0
        %458 = vmatpush1.bf16.msra.mxu0 %v438
        %459 = vmatprep.subr.bf16.mxu0 0
        %460 = vmatpush1.bf16.msra.mxu0 %v437
        %461 = vmatprep.subr.bf16.mxu0 0
        %462 = vmatpush2.bf16.msra.mxu0 0
        %463 = vmatprep.subr.bf16.mxu0 0
        %464 = vmatpush2.bf16.msra.mxu0 0
        %465 = vmatprep.subr.bf16.mxu0 0
        %466 = vmatpush2.bf16.msra.mxu0 0
        %467 = vmatprep.subr.bf16.mxu0 0
        %468 = vmatpush2.bf16.msra.mxu0 0
        %469 = vmatprep.subr.bf16.mxu0 0
        %470 = vmatpush2.bf16.msra.mxu0 0
        %471 = vmatprep.subr.bf16.mxu0 0
        %472 = vmatpush2.bf16.msra.mxu0 0
        %473 = vmatprep.subr.bf16.mxu0 0
        %474 = vmatpush2.bf16.msra.mxu0 0
        %475 = vmatprep.subr.bf16.mxu0 0
        %476 = vmatpush2.bf16.msra.mxu0 0
        %477 = vmatprep.mubr.bf16.mxu0 0
        %478 = vmatmul.mubr.bf16.gmra.mxu0 %v443
        %v479 = vpop.f32.mrf.mxu0
        %v480 = vadd.f32 0.0, %v479
        %v481 = vpop.f32.mrf.mxu0
        %v482 = vpop.f32.mrf.mxu0
        %v483 = vpop.f32.mrf.mxu0
        %484 = vdwg.mxu0
        %v485 = vpack.c.bf16 %v480, %v480
        %v490 = vunpack.c.l.b16 %v420
        %v491 = vunpack.c.l.b16 %v421
        %v492 = vunpack.c.l.b16 %v422
        %v493 = vunpack.c.l.b16 %v423
        %v494 = vpack.c.b16 %v491, %v490
        %v495 = vpack.c.b16 %v493, %v492
        %v499 = vsel %vm441, %v415, 0
        %501 = vmatprep.subr.bf16.mxu0 0
        %502 = vmatpush1.bf16.msra.mxu0 0
        %503 = vmatprep.subr.bf16.mxu0 0
        %504 = vmatpush1.bf16.msra.mxu0 0
        %505 = vmatprep.subr.bf16.mxu0 0
        %506 = vmatpush1.bf16.msra.mxu0 0
        %507 = vmatprep.subr.bf16.mxu0 0
        %508 = vmatpush1.bf16.msra.mxu0 0
        %509 = vmatprep.subr.bf16.mxu0 0
        %510 = vmatpush1.bf16.msra.mxu0 0
        %511 = vmatprep.subr.bf16.mxu0 0
        %512 = vmatpush1.bf16.msra.mxu0 0
        %513 = vmatprep.subr.bf16.mxu0 0
        %514 = vmatpush1.bf16.msra.mxu0 %v495
        %515 = vmatprep.subr.bf16.mxu0 0
        %516 = vmatpush1.bf16.msra.mxu0 %v494
        %517 = vmatprep.subr.bf16.mxu0 0
        %518 = vmatpush2.bf16.msra.mxu0 0
        %519 = vmatprep.subr.bf16.mxu0 0
        %520 = vmatpush2.bf16.msra.mxu0 0
        %521 = vmatprep.subr.bf16.mxu0 0
        %522 = vmatpush2.bf16.msra.mxu0 0
        %523 = vmatprep.subr.bf16.mxu0 0
        %524 = vmatpush2.bf16.msra.mxu0 0
        %525 = vmatprep.subr.bf16.mxu0 0
        %526 = vmatpush2.bf16.msra.mxu0 0
        %527 = vmatprep.subr.bf16.mxu0 0
        %528 = vmatpush2.bf16.msra.mxu0 0
        %529 = vmatprep.subr.bf16.mxu0 0
        %530 = vmatpush2.bf16.msra.mxu0 0
        %531 = vmatprep.subr.bf16.mxu0 0
        %532 = vmatpush2.bf16.msra.mxu0 0
        %533 = vmatprep.mubr.bf16.mxu0 0
        %534 = vmatmul.mubr.bf16.gmra.mxu0 %v499
        %v535 = vpop.f32.mrf.mxu0
        %v536 = vadd.f32 0.0, %v535
        %v537 = vpop.f32.mrf.mxu0
        %v538 = vpop.f32.mrf.mxu0
        %v539 = vpop.f32.mrf.mxu0
        %540 = vdwg.mxu0
        %v541 = vpack.c.bf16 %v536, %v536
        %v546 = vunpack.c.l.b16 %v424
        %v547 = vunpack.c.l.b16 %v425
        %v548 = vunpack.c.l.b16 %v426
        %v549 = vunpack.c.l.b16 %v427
        %v550 = vpack.c.b16 %v547, %v546
        %v551 = vpack.c.b16 %v549, %v548
        %554 = vmatprep.subr.bf16.mxu0 0
        %555 = vmatpush1.bf16.msra.mxu0 0
        %556 = vmatprep.subr.bf16.mxu0 0
        %557 = vmatpush1.bf16.msra.mxu0 0
        %558 = vmatprep.subr.bf16.mxu0 0
        %559 = vmatpush1.bf16.msra.mxu0 0
        %560 = vmatprep.subr.bf16.mxu0 0
        %561 = vmatpush1.bf16.msra.mxu0 0
        %562 = vmatprep.subr.bf16.mxu0 0
        %563 = vmatpush1.bf16.msra.mxu0 0
        %564 = vmatprep.subr.bf16.mxu0 0
        %565 = vmatpush1.bf16.msra.mxu0 0
        %566 = vmatprep.subr.bf16.mxu0 0
        %567 = vmatpush1.bf16.msra.mxu0 %v551
        %568 = vmatprep.subr.bf16.mxu0 0
        %569 = vmatpush1.bf16.msra.mxu0 %v550
        %570 = vmatprep.subr.bf16.mxu0 0
        %571 = vmatpush2.bf16.msra.mxu0 0
        %572 = vmatprep.subr.bf16.mxu0 0
        %573 = vmatpush2.bf16.msra.mxu0 0
        %574 = vmatprep.subr.bf16.mxu0 0
        %575 = vmatpush2.bf16.msra.mxu0 0
        %576 = vmatprep.subr.bf16.mxu0 0
        %577 = vmatpush2.bf16.msra.mxu0 0
        %578 = vmatprep.subr.bf16.mxu0 0
        %579 = vmatpush2.bf16.msra.mxu0 0
        %580 = vmatprep.subr.bf16.mxu0 0
        %581 = vmatpush2.bf16.msra.mxu0 0
        %582 = vmatprep.subr.bf16.mxu0 0
        %583 = vmatpush2.bf16.msra.mxu0 0
        %584 = vmatprep.subr.bf16.mxu0 0
        %585 = vmatpush2.bf16.msra.mxu0 0
        %586 = vmatprep.mubr.bf16.mxu0 0
        %587 = vmatmul.mubr.bf16.gmra.mxu0 %v499
        %v588 = vpop.f32.mrf.mxu0
        %v589 = vadd.f32 0.0, %v588
        %v590 = vpop.f32.mrf.mxu0
        %v591 = vpop.f32.mrf.mxu0
        %v592 = vpop.f32.mrf.mxu0
        %593 = vdwg.mxu0
        %v594 = vpack.c.bf16 %v589, %v589
        %vm595 = vcmask 31744
        %v597 = vsel %vm595, %v485, 0
        %v600 = vsel %vm595, %v541, 0
        %602 = vmatprep.subr.bf16.mxu0 0
        %603 = vmatpush1.bf16.xpose.msra.mxu0 0
        %604 = vmatprep.subr.bf16.mxu0 0
        %605 = vmatpush1.bf16.xpose.msra.mxu0 0
        %606 = vmatprep.subr.bf16.mxu0 0
        %607 = vmatpush1.bf16.xpose.msra.mxu0 0
        %608 = vmatprep.subr.bf16.mxu0 0
        %609 = vmatpush1.bf16.xpose.msra.mxu0 0
        %610 = vmatprep.subr.bf16.mxu0 0
        %611 = vmatpush1.bf16.xpose.msra.mxu0 0
        %612 = vmatprep.subr.bf16.mxu0 0
        %613 = vmatpush1.bf16.xpose.msra.mxu0 0
        %614 = vmatprep.subr.bf16.mxu0 0
        %615 = vmatpush1.bf16.xpose.msra.mxu0 0
        %616 = vmatprep.subr.bf16.mxu0 0
        %617 = vmatpush1.bf16.xpose.msra.mxu0 %v600
        %618 = vmatprep.subr.bf16.mxu0 0
        %619 = vmatpush2.bf16.xpose.msra.mxu0 0
        %620 = vmatprep.subr.bf16.mxu0 0
        %621 = vmatpush2.bf16.xpose.msra.mxu0 0
        %622 = vmatprep.subr.bf16.mxu0 0
        %623 = vmatpush2.bf16.xpose.msra.mxu0 0
        %624 = vmatprep.subr.bf16.mxu0 0
        %625 = vmatpush2.bf16.xpose.msra.mxu0 0
        %626 = vmatprep.subr.bf16.mxu0 0
        %627 = vmatpush2.bf16.xpose.msra.mxu0 0
        %628 = vmatprep.subr.bf16.mxu0 0
        %629 = vmatpush2.bf16.xpose.msra.mxu0 0
        %630 = vmatprep.subr.bf16.mxu0 0
        %631 = vmatpush2.bf16.xpose.msra.mxu0 0
        %632 = vmatprep.subr.bf16.mxu0 0
        %633 = vmatpush2.bf16.xpose.msra.mxu0 0
        %634 = vmatprep.mubr.bf16.mxu0 0
        %635 = vmatmul.mubr.bf16.gmra.mxu0 %v597
        %v636 = vpop.f32.mrf.mxu0
        %v637 = vadd.f32 0.0, %v636
        %v638 = vpop.f32.mrf.mxu0
        %v639 = vpop.f32.mrf.mxu0
        %v640 = vpop.f32.mrf.mxu0
        %641 = vdwg.mxu0
        %vm642 = vcmask 64512
        %v643 = vsel %vm642, %v637, -inf
        %644 = vmax.xlane.f32.xlu0 %v643
        %v645 = vpop.xlane.xlu0 %644
        %v646 = vsub.f32 %v637, %v645
        %v647 = vmul.f32 %v646, 1.442695
        %v648 = vpow.pop %v647
        %v649 = vsel %vm642, %v648, 0.0
        %650 = vadd.xlane.f32.xlu0 %v649
        %v651 = vpop.xlane.xlu0 %650
        %v652 = vrcp.pop %v651
        %v653 = vmul.f32 %v648, %v652
        %v654 = vpack.c.bf16 %v653, %v653
        %v656 = vsel %vm642, %v654, 0
        %vm658 = vcmask 1043456
        %v660 = vsel %vm658, %v594, 0
        %662 = vmatprep.subr.bf16.mxu0 0
        %663 = vmatpush1.bf16.msra.mxu0 0
        %664 = vmatprep.subr.bf16.mxu0 0
        %665 = vmatpush1.bf16.msra.mxu0 0
        %666 = vmatprep.subr.bf16.mxu0 0
        %667 = vmatpush1.bf16.msra.mxu0 0
        %668 = vmatprep.subr.bf16.mxu0 0
        %669 = vmatpush1.bf16.msra.mxu0 0
        %670 = vmatprep.subr.bf16.mxu0 0
        %671 = vmatpush1.bf16.msra.mxu0 0
        %672 = vmatprep.subr.bf16.mxu0 0
        %673 = vmatpush1.bf16.msra.mxu0 0
        %674 = vmatprep.subr.bf16.mxu0 0
        %675 = vmatpush1.bf16.msra.mxu0 0
        %676 = vmatprep.subr.bf16.mxu0 0
        %677 = vmatpush1.bf16.msra.mxu0 %v660
        %678 = vmatprep.subr.bf16.mxu0 0
        %679 = vmatpush2.bf16.msra.mxu0 0
        %680 = vmatprep.subr.bf16.mxu0 0
        %681 = vmatpush2.bf16.msra.mxu0 0
        %682 = vmatprep.subr.bf16.mxu0 0
        %683 = vmatpush2.bf16.msra.mxu0 0
        %684 = vmatprep.subr.bf16.mxu0 0
        %685 = vmatpush2.bf16.msra.mxu0 0
        %686 = vmatprep.subr.bf16.mxu0 0
        %687 = vmatpush2.bf16.msra.mxu0 0
        %688 = vmatprep.subr.bf16.mxu0 0
        %689 = vmatpush2.bf16.msra.mxu0 0
        %690 = vmatprep.subr.bf16.mxu0 0
        %691 = vmatpush2.bf16.msra.mxu0 0
        %692 = vmatprep.subr.bf16.mxu0 0
        %693 = vmatpush2.bf16.msra.mxu0 0
        %694 = vmatprep.mubr.bf16.mxu0 0
        %695 = vmatmul.mubr.bf16.gmra.mxu0 %v656
        %v696 = vpop.f32.mrf.mxu0
        %v697 = vadd.f32 0.0, %v696
        %v698 = vpop.f32.mrf.mxu0
        %v699 = vpop.f32.mrf.mxu0
        %v700 = vpop.f32.mrf.mxu0
        %701 = vdwg.mxu0
        %v702 = vld [vmem:[#allocation2] sm:$0xff]
        %v703 = vpack.c.bf16 %v697, %v697
        %v705 = vsel %vm595, %v703, 0
        %vm707 = vcmask 1041408
        %v709 = vsel %vm707, %v428, 0
        %711 = vmatprep.subr.bf16.mxu0 0
        %712 = vmatpush1.bf16.msra.mxu0 0
        %713 = vmatprep.subr.bf16.mxu0 0
        %714 = vmatpush1.bf16.msra.mxu0 0
        %715 = vmatprep.subr.bf16.mxu0 0
        %716 = vmatpush1.bf16.msra.mxu0 0
        %717 = vmatprep.subr.bf16.mxu0 0
        %718 = vmatpush1.bf16.msra.mxu0 0
        %719 = vmatprep.subr.bf16.mxu0 0
        %720 = vmatpush1.bf16.msra.mxu0 0
        %721 = vmatprep.subr.bf16.mxu0 0
        %722 = vmatpush1.bf16.msra.mxu0 0
        %723 = vmatprep.subr.bf16.mxu0 0
        %724 = vmatpush1.bf16.msra.mxu0 0
        %725 = vmatprep.subr.bf16.mxu0 0
        %726 = vmatpush1.bf16.msra.mxu0 %v709
        %727 = vmatprep.subr.bf16.mxu0 0
        %728 = vmatpush2.bf16.msra.mxu0 0
        %729 = vmatprep.subr.bf16.mxu0 0
        %730 = vmatpush2.bf16.msra.mxu0 0
        %731 = vmatprep.subr.bf16.mxu0 0
        %732 = vmatpush2.bf16.msra.mxu0 0
        %733 = vmatprep.subr.bf16.mxu0 0
        %734 = vmatpush2.bf16.msra.mxu0 0
        %735 = vmatprep.subr.bf16.mxu0 0
        %736 = vmatpush2.bf16.msra.mxu0 0
        %737 = vmatprep.subr.bf16.mxu0 0
        %738 = vmatpush2.bf16.msra.mxu0 0
        %739 = vmatprep.subr.bf16.mxu0 0
        %740 = vmatpush2.bf16.msra.mxu0 0
        %741 = vmatprep.subr.bf16.mxu0 0
        %742 = vmatpush2.bf16.msra.mxu0 0
        %743 = vmatprep.mubr.bf16.mxu0 0
        %744 = vmatmul.mubr.bf16.gmra.mxu0 %v705
        %v745 = vpop.f32.mrf.mxu0
        %v746 = vadd.f32 0.0, %v745
        %v747 = vpop.f32.mrf.mxu0
        %v748 = vpop.f32.mrf.mxu0
        %v749 = vpop.f32.mrf.mxu0
        %750 = vdwg.mxu0
        %v751 = vadd.f32 %v702, %v746
        %752 = vst.msk [vmem:[#allocation2] sm:$0xff] %vm441, %v751
        %p753 = scmp.eq.s32.totalorder %s28, 7
        // Predicated region
        $region53: #{tpu_custom_call.1} parent=47 // pred_check
          %p754 = pneg %p753
        $region54: #{tpu_custom_call.1} parent=47 // pred_check_branch
          %756 = sbr.rel (%p754) target = $region56
        $region55: #{tpu_custom_call.1} parent=47 // pred_region
          %v757 = vld [vmem:[#allocation2] sm:$0xff]
          %758 = vst.msk [vmem:[%s369] sm:$0xff] %vm441, %v757
        $region56: #{tpu_custom_call.1} parent=47 // pred_fallthru
          _
        %s759 = sand.u32 %s229, 1
        %s760 = scalar_lea.sflag [#allocation4], %s759
        %s761 = sand.u32 %s229, 1
        %s762 = smul.addr %s761, 8
        %s763 = scalar_lea.vmem [#allocation3], %s762
        // Predicated region
        $region57: #{tpu_custom_call.1} parent=47 // pred_check
          %p764 = pneg %p239
        $region58: #{tpu_custom_call.1} parent=47 // pred_check_branch
          %766 = sbr.rel (%p764) target = $region60
        $region59: #{tpu_custom_call.1} parent=47 // pred_region
          %s768 = ssub.s32 128, 128
          %769 = vsyncadd %s760, %s768
          %s770 = sadd.s32 %s27, %s26
          %s771 = smul.addr %s770, 128
          %s772 = scalar_lea.hbm %s7, %s771
          %s774 = sshll.u32 %s763, 4
          %s775 = int_to_ptr.vmem [resolvable:$true] %s774
          %777 = dma.vmem_to_hbm [thread:$0]  %s775, 128, %s772, %s760
        $region60: #{tpu_custom_call.1} parent=47 // pred_fallthru
          _
      $region48: #{tpu_custom_call.1} parent=5 // pred_fallthru
        _
      %p778 = scmp.le.s32.totalorder 2, %s16
      // Predicated region
      $region61: #{tpu_custom_call.1} parent=5 // pred_check
        %p779 = pneg %p778
      $region62: #{tpu_custom_call.1} parent=5 // pred_check_branch
        %781 = sbr.rel (%p779) target = $region64
      $region63: #{tpu_custom_call.1} parent=5 // pred_region
        %s782 = ssub.s32 %s16, 2
        // Predicated region
        $region65: #{tpu_custom_call.1} parent=63 // pred_check
          %p783 = pneg %p245
        $region66: #{tpu_custom_call.1} parent=63 // pred_check_branch
          %785 = sbr.rel (%p783) target = $region68
        $region67: #{tpu_custom_call.1} parent=63 // pred_region
          %s786 = sand.u32 %s230, 1
          %s787 = scalar_lea.sflag [#allocation4], %s786
          %s788 = sand.u32 %s230, 1
          %s789 = smul.addr %s788, 8
          %s790 = scalar_lea.vmem [#allocation3], %s789
          %791 = dma.done %s787, 128
        $region68: #{tpu_custom_call.1} parent=63 // pred_fallthru
          _
      $region64: #{tpu_custom_call.1} parent=5 // pred_fallthru
        _
    $region6: #{tpu_custom_call.1} parent=1 // loop_footer
      %s20 = sadd.s32 1, %s16
    $region7: #{tpu_custom_call.1} parent=1 // loop_footer_branch
      %15 = sbr.rel target = $region3
    $region8: #{tpu_custom_call.1} parent=1 // loop_exit
      _
    %792 = vsyncpa [#allocation4], 1
    %s793 = scalar_lea.sflag [#allocation4], 1
    %794 = vsyncpa %s793, 1

</llo_original>
